<compile_context>
chip_gen: v5e
topology: v5e:2x2
jax: 0.10.0
libtpu: 0.0.40
codegen_flags: <defaults>
</compile_context>

<pallas_src>
import functools

import jax
import jax.numpy as jnp
from jax.experimental import pallas as pl
from jax.experimental.pallas import tpu as pltpu

_EPS = 1e-6
_MARGIN = 1.3  # pairwise=True overrides the constructor margin to 1.3


def _vmem_capacity_bytes(default=64 * 1024 * 1024):
    """Physical VMEM capacity (v5e/v6e: 128 MiB, v7x: 64 MiB); safe fallback."""
    try:
        info = pltpu.get_tpu_info()
        cap = getattr(info, "vmem_capacity_bytes", None)
        if cap:
            return int(cap)
    except Exception:
        pass
    return default


def _triplet_loss_kernel(a_ref, p_ref, n_ref, out_ref, acc_ref, *,
                         n_rows, blocks_per_split, needs_mask):
    s = pl.program_id(0)          # split ("parallel") axis
    i = pl.program_id(1)          # block ("arbitrary") reduction axis
    tile = a_ref.shape[0]

    @pl.when(i == 0)
    def _init():
        acc_ref[...] = jnp.zeros_like(acc_ref)

    # Load in native dtype, cast each ref to f32 exactly once.
    a = a_ref[...].astype(jnp.float32)
    p = p_ref[...].astype(jnp.float32)
    n = n_ref[...].astype(jnp.float32)

    # PairwiseDistance: ||x1 - x2 + eps||_2 along the embedding (lane) dim.
    diff_p = a - p + _EPS
    diff_n = a - n + _EPS
    dp = jnp.sqrt(jnp.sum(diff_p * diff_p, axis=-1, keepdims=True))  # (tile, 1)
    dn = jnp.sqrt(jnp.sum(diff_n * diff_n, axis=-1, keepdims=True))  # (tile, 1)
    losses = jnp.maximum(dp - dn + _MARGIN, 0.0)                     # (tile, 1)

    if needs_mask:
        # Mask rows beyond N: padded rows of a partial last block, and blocks
        # whose (unclamped) index over-ran the array (clamped duplicate DMA).
        row = (s * blocks_per_split + i) * tile + \
            jax.lax.broadcasted_iota(jnp.int32, (tile, 1), 0)
        losses = jnp.where(row < n_rows, losses, 0.0)

    # Per-row vector accumulation: plain VPU adds, no per-step cross-sublane
    # reduce or scalar read-modify-write in the loop-carried chain.
    acc_ref[...] += losses

    @pl.when(i == pl.num_programs(1) - 1)
    def _finalize():
        total = jnp.sum(acc_ref[...])                       # once per split
        out_ref[...] = jnp.broadcast_to(total, (1, 1, 128)).astype(jnp.float32)


def triplet_loss(a, p, n, *, tile_rows=None, num_splits=2):
    """Pallas TPU implementation of TripletLoss(pairwise=True).forward(a, p, n)."""
    assert a.shape == p.shape == n.shape and a.ndim == 2
    assert a.dtype == p.dtype == n.dtype
    N, D = a.shape
    itemsize = jnp.dtype(a.dtype).itemsize

    vmem_cap = _vmem_capacity_bytes()

    if tile_rows is None:
        # Budget-driven tile: 3 inputs x 2 pipeline buffers in native dtype,
        # plus headroom for the f32 working set (casts + diffs) and the
        # lane-padded (tile,1)->(tile,128) f32 accumulator scratch.
        budget = int(vmem_cap * 0.45)
        bytes_per_row = 3 * 2 * D * itemsize + 6 * D * 4 + 128 * 4
        tile_rows = max(16, (budget // bytes_per_row) // 16 * 16)
    tile = N if tile_rows >= N else int(tile_rows)

    nblocks = pl.cdiv(N, tile)
    # Split the row range across TensorCores (v7x has 2); on 1-TC chips the
    # extra "parallel" step runs sequentially and costs ~nothing.
    S = max(1, min(int(num_splits), nblocks))
    B = pl.cdiv(nblocks, S)
    needs_mask = (S * B * tile != N)

    def in_map(s, i):
        # Clamp so over-ran grid points re-read the last valid block (their
        # rows are fully masked in the kernel, so they contribute zero).
        return (jnp.minimum(s * B + i, nblocks - 1), 0)

    in_spec = pl.BlockSpec((tile, D), in_map)

    kernel = functools.partial(
        _triplet_loss_kernel,
        n_rows=N, blocks_per_split=B, needs_mask=needs_mask)

    partials = pl.pallas_call(
        kernel,
        out_shape=jax.ShapeDtypeStruct((S, 1, 128), jnp.float32),
        grid=(S, B),
        in_specs=[in_spec, in_spec, in_spec],
        out_specs=pl.BlockSpec((1, 1, 128), lambda s, i: (s, 0, 0)),
        scratch_shapes=[pltpu.VMEM((tile, 1), jnp.float32)],
        compiler_params=pltpu.CompilerParams(
            dimension_semantics=("parallel", "arbitrary"),
            vmem_limit_bytes=int(vmem_cap * 0.85)),
    )(a, p, n)

    # Final cross-split reduction + mean in the wrapper (tiny XLA op).
    return jnp.sum(partials[:, 0, 0]) / jnp.float32(N)


def _triplet_loss_ref(a, p, n):
    a = a.astype(jnp.float32)
    p = p.astype(jnp.float32)
    n = n.astype(jnp.float32)
    dp = jnp.sqrt(jnp.sum((a - p + _EPS) ** 2, axis=-1))
    dn = jnp.sqrt(jnp.sum((a - n + _EPS) ** 2, axis=-1))
    return jnp.mean(jnp.maximum(dp - dn + _MARGIN, 0.0))


if __name__ == "__main__":
    key = jax.random.PRNGKey(0)
    k_a, k_p, k_n = jax.random.split(key, 3)

    N, D = 20, 128  # small batch of embeddings (N deliberately not a tile multiple)
    a = jax.random.normal(k_a, (N, D), dtype=jnp.float32)
    p = jax.random.normal(k_p, (N, D), dtype=jnp.float32)
    n = jax.random.normal(k_n, (N, D), dtype=jnp.float32)
    ref = jax.block_until_ready(_triplet_loss_ref(a, p, n))

    # Test 1: default budget-sized tile (single full-extent block, no mask).
    out_full = jax.block_until_ready(triplet_loss(a, p, n))
    assert jnp.allclose(out_full, ref, atol=1e-5, rtol=1e-5), (out_full, ref)

    # Test 2: tile_rows=8, 2-way split -> grid (2, 2) with a clamped duplicate
    # block and masked padded rows of the partial last block.
    out_tiled = jax.block_until_ready(triplet_loss(a, p, n, tile_rows=8, num_splits=2))
    assert jnp.allclose(out_tiled, ref, atol=1e-5, rtol=1e-5), (out_tiled, ref)

    # Test 3: bf16 inputs consumed natively (upcast to f32 inside the kernel),
    # 2 splits x 1 block each, masked padded rows.
    ab, pb, nb = (x.astype(jnp.bfloat16) for x in (a, p, n))
    ref_bf16 = jax.block_until_ready(_triplet_loss_ref(ab, pb, nb))
    out_bf16 = jax.block_until_ready(triplet_loss(ab, pb, nb, tile_rows=16, num_splits=2))
    assert jnp.allclose(out_bf16, ref_bf16, atol=1e-5, rtol=1e-5), (out_bf16, ref_bf16)

    print("KERNEL_OK")
</pallas_src>

<mosaic_0001>
module attributes {stable_mosaic.version = 11 : i64} {
  func.func @_triplet_loss_kernel(%arg0: i32, %arg1: i32, %arg2: memref<20x128xf32, #tpu.memory_space<vmem>>, %arg3: memref<20x128xf32, #tpu.memory_space<vmem>>, %arg4: memref<20x128xf32, #tpu.memory_space<vmem>>, %arg5: memref<1x1x128xf32, #tpu.memory_space<vmem>>, %arg6: memref<20x1xf32, #tpu.memory_space<vmem>>) attributes {dimension_semantics = [#tpu.dimension_semantics<parallel>, #tpu.dimension_semantics<arbitrary>], iteration_bounds = array<i64: 1, 1>, scalar_prefetch = 0 : i64, scratch_operands = 1 : i64, tpu.core_type = #tpu.core_type<tc>, window_params = [{transform_indices = @transform_0, window_bounds = array<i64: 20, 128>}, {transform_indices = @transform_1, window_bounds = array<i64: 20, 128>}, {transform_indices = @transform_2, window_bounds = array<i64: 20, 128>}, {transform_indices = @transform_3, window_bounds = array<i64: 1, 1, 128>}]} {
    %c0_i32 = arith.constant 0 : i32
    %0 = arith.cmpi eq, %arg1, %c0_i32 : i32
    %1 = arith.extui %0 : i1 to i32
    %c0_i32_0 = arith.constant 0 : i32
    %2 = arith.cmpi ne, %1, %c0_i32_0 : i32
    scf.if %2 {
      %cst_17 = arith.constant 0.000000e+00 : f32
      %31 = vector.broadcast %cst_17 : f32 to vector<20x1xf32>
      %c0_18 = arith.constant 0 : index
      %c0_19 = arith.constant 0 : index
      %32 = vector.load %arg6[%c0_18, %c0_19] : memref<20x1xf32, #tpu.memory_space<vmem>>, vector<20x1xf32>
      tpu.vector_store %arg6[%c0_18, %c0_19], %31 {strides = array<i32>} : memref<20x1xf32, #tpu.memory_space<vmem>>, vector<20x1xf32>,
    } else {
    }
    %c0 = arith.constant 0 : index
    %c0_1 = arith.constant 0 : index
    %3 = vector.load %arg2[%c0, %c0_1] : memref<20x128xf32, #tpu.memory_space<vmem>>, vector<20x128xf32>
    %c0_2 = arith.constant 0 : index
    %c0_3 = arith.constant 0 : index
    %4 = vector.load %arg3[%c0_2, %c0_3] : memref<20x128xf32, #tpu.memory_space<vmem>>, vector<20x128xf32>
    %c0_4 = arith.constant 0 : index
    %c0_5 = arith.constant 0 : index
    %5 = vector.load %arg4[%c0_4, %c0_5] : memref<20x128xf32, #tpu.memory_space<vmem>>, vector<20x128xf32>
    %6 = arith.subf %3, %4 : vector<20x128xf32>
    %cst = arith.constant 9.99999997E-7 : f32
    %7 = vector.broadcast %cst : f32 to vector<20x128xf32>
    %8 = arith.addf %6, %7 : vector<20x128xf32>
    %9 = arith.subf %3, %5 : vector<20x128xf32>
    %cst_6 = arith.constant 9.99999997E-7 : f32
    %10 = vector.broadcast %cst_6 : f32 to vector<20x128xf32>
    %11 = arith.addf %9, %10 : vector<20x128xf32>
    %12 = arith.mulf %8, %8 : vector<20x128xf32>
    %cst_7 = arith.constant dense<0.000000e+00> : vector<20xf32>
    %13 = vector.multi_reduction <add>, %12, %cst_7 [1] : vector<20x128xf32> to vector<20xf32>
    %14 = vector.shape_cast %13 : vector<20xf32> to vector<20x1xf32>
    %15 = math.sqrt %14 : vector<20x1xf32>
    %16 = arith.mulf %11, %11 : vector<20x128xf32>
    %cst_8 = arith.constant dense<0.000000e+00> : vector<20xf32>
    %17 = vector.multi_reduction <add>, %16, %cst_8 [1] : vector<20x128xf32> to vector<20xf32>
    %18 = vector.shape_cast %17 : vector<20xf32> to vector<20x1xf32>
    %19 = math.sqrt %18 : vector<20x1xf32>
    %20 = arith.subf %15, %19 : vector<20x1xf32>
    %cst_9 = arith.constant 1.300000e+00 : f32
    %21 = vector.broadcast %cst_9 : f32 to vector<20x1xf32>
    %22 = arith.addf %20, %21 : vector<20x1xf32>
    %cst_10 = arith.constant 0.000000e+00 : f32
    %23 = vector.broadcast %cst_10 : f32 to vector<20x1xf32>
    %24 = arith.maximumf %22, %23 : vector<20x1xf32>
    %c0_11 = arith.constant 0 : index
    %c0_12 = arith.constant 0 : index
    %25 = vector.load %arg6[%c0_11, %c0_12] : memref<20x1xf32, #tpu.memory_space<vmem>>, vector<20x1xf32>
    %26 = arith.addf %25, %24 : vector<20x1xf32>
    %c0_13 = arith.constant 0 : index
    %c0_14 = arith.constant 0 : index
    %27 = vector.load %arg6[%c0_13, %c0_14] : memref<20x1xf32, #tpu.memory_space<vmem>>, vector<20x1xf32>
    tpu.vector_store %arg6[%c0_13, %c0_14], %26 {strides = array<i32>} : memref<20x1xf32, #tpu.memory_space<vmem>>, vector<20x1xf32>,
    %c0_i32_15 = arith.constant 0 : i32
    %28 = arith.cmpi eq, %arg1, %c0_i32_15 : i32
    %29 = arith.extui %28 : i1 to i32
    %c0_i32_16 = arith.constant 0 : i32
    %30 = arith.cmpi ne, %29, %c0_i32_16 : i32
    scf.if %30 {
      %c0_17 = arith.constant 0 : index
      %c0_18 = arith.constant 0 : index
      %31 = vector.load %arg6[%c0_17, %c0_18] : memref<20x1xf32, #tpu.memory_space<vmem>>, vector<20x1xf32>
      %32 = vector.shape_cast %31 : vector<20x1xf32> to vector<1x20x1xf32>
      %cst_19 = arith.constant dense<0.000000e+00> : vector<1xf32>
      %33 = vector.multi_reduction <add>, %32, %cst_19 [1, 2] : vector<1x20x1xf32> to vector<1xf32>
      %34 = vector.shape_cast %33 : vector<1xf32> to vector<1x1x1xf32>
      %35 = vector.extract %34[0, 0, 0] : f32 from vector<1x1x1xf32>
      %36 = vector.broadcast %35 : f32 to vector<1x1x128xf32>
      %c0_20 = arith.constant 0 : index
      %c0_21 = arith.constant 0 : index
      %c0_22 = arith.constant 0 : index
      %37 = vector.load %arg5[%c0_20, %c0_21, %c0_22] : memref<1x1x128xf32, #tpu.memory_space<vmem>>, vector<1x1x128xf32>
      tpu.vector_store %arg5[%c0_20, %c0_21, %c0_22], %36 {strides = array<i32>} : memref<1x1x128xf32, #tpu.memory_space<vmem>>, vector<1x1x128xf32>,
    } else {
    }
    return
  }
  func.func @transform_0(%arg0: i32, %arg1: i32) -> (i32, i32) {
    %c1_i32 = arith.constant 1 : i32
    %0 = arith.muli %arg0, %c1_i32 : i32
    %1 = arith.addi %0, %arg1 : i32
    %c0_i32 = arith.constant 0 : i32
    %2 = arith.minsi %1, %c0_i32 : i32
    %c0_i32_0 = arith.constant 0 : i32
    %c0_i32_1 = arith.constant 0 : i32
    return %2, %c0_i32_0 : i32, i32
  }
  func.func @transform_1(%arg0: i32, %arg1: i32) -> (i32, i32) {
    %c1_i32 = arith.constant 1 : i32
    %0 = arith.muli %arg0, %c1_i32 : i32
    %1 = arith.addi %0, %arg1 : i32
    %c0_i32 = arith.constant 0 : i32
    %2 = arith.minsi %1, %c0_i32 : i32
    %c0_i32_0 = arith.constant 0 : i32
    %c0_i32_1 = arith.constant 0 : i32
    return %2, %c0_i32_0 : i32, i32
  }
  func.func @transform_2(%arg0: i32, %arg1: i32) -> (i32, i32) {
    %c1_i32 = arith.constant 1 : i32
    %0 = arith.muli %arg0, %c1_i32 : i32
    %1 = arith.addi %0, %arg1 : i32
    %c0_i32 = arith.constant 0 : i32
    %2 = arith.minsi %1, %c0_i32 : i32
    %c0_i32_0 = arith.constant 0 : i32
    %c0_i32_1 = arith.constant 0 : i32
    return %2, %c0_i32_0 : i32, i32
  }
  func.func @transform_3(%arg0: i32, %arg1: i32) -> (i32, i32, i32) {
    %c0_i32 = arith.constant 0 : i32
    %c0_i32_0 = arith.constant 0 : i32
    %c0_i32_1 = arith.constant 0 : i32
    return %arg0, %c0_i32, %c0_i32_0 : i32, i32, i32
  }
}

</mosaic_0001>

<llo_original>
// kernel: tpu_custom_call.1
$region0: #{tpu_custom_call.1}
  #allocation0 [shape = 'u32[]', space=smem, size = 0x4, offset = 0x4, fixed_abs, tag = 'smem constant byte address 0x4 - core index']
  #allocation1 [shape = 'u32[72,128]{1,0:T(1,128)}', space=vmem, size = 0x9000, scoped, tag = 'internal scratch']
  #allocation2 [shape = 'f32[20,1]{1,0:T(8,128)}', space=vmem, size = 0x3000, scoped, tag = 'scratch operand']
  %s0 = inlined_call_operand.hbm [shape: f32[20,128], index: 0, kind: input, shape index: {}]
  %s1 = inlined_call_operand.hbm [shape: f32[20,128], index: 1, kind: input, shape index: {}]
  %s2 = inlined_call_operand.hbm [shape: f32[20,128], index: 2, kind: input, shape index: {}]
  %s3 = inlined_call_operand.hbm [shape: f32[1,1,128], index: 3, kind: output, shape index: {}]
  %s4 = sld [smem:[#allocation0]]
  $region42: #{tpu_custom_call.1} parent=0
    _
  %s6 = ssub.s32 1, %s4
  %s7 = scalar_select 0, %s6, %s4
  $region1: #{tpu_custom_call.1} parent=0
    #allocation3 [shape = 'u8[12288]{0}', space=vmem, size = 0x3000, scoped, tag = 'input window, operand 0, single buffered']
    #allocation4 [shape = 's32[1]{0}', space=sflag, size = 0x4, scoped, tag = 'scoped memory for tpu_custom_call.1']
    #allocation5 [shape = 's32[1]{0}', space=sflag, size = 0x4, scoped, tag = 'scoped memory for tpu_custom_call.1']
    #allocation6 [shape = 'u8[12288]{0}', space=vmem, size = 0x3000, scoped, tag = 'input window, operand 1, single buffered']
    #allocation7 [shape = 's32[1]{0}', space=sflag, size = 0x4, scoped, tag = 'scoped memory for tpu_custom_call.1']
    #allocation8 [shape = 'u8[12288]{0}', space=vmem, size = 0x3000, scoped, tag = 'input window, operand 2, single buffered']
    #allocation9 [shape = 'u8[512]{0}', space=vmem, size = 0x400, scoped, tag = 'output window, operand 0, single buffered']
    %8 = vsyncpa [#allocation4], 0
    %9 = vsyncpa [#allocation7], 0
    %10 = vsyncpa [#allocation5], 0
    // Predicated region
    $region2: #{tpu_custom_call.1} parent=1 // pred_check
      _
    $region3: #{tpu_custom_call.1} parent=1 // pred_check_branch
      %12 = sbr.rel (0) target = $region5
    $region4: #{tpu_custom_call.1} parent=1 // pred_region
      %s13 = sadd.s32 0, 0
      %p14 = scmp.lt.s32.totalorder %s13, 0
      %s15 = scalar_select %p14, %s13, 0
      %s16 = smul.u32 3, %s15
      %18 = vsyncadd [#allocation4], 0
      %s19 = smul.addr %s16, 8
      %s20 = scalar_lea.hbm %s0, %s19
      %s21 = sshll.u32 %s20, 4
      %s22 = int_to_ptr.hbm [resolvable:$true] %s21
      %s23 = sshll.u32 [#allocation3], 4
      %s24 = int_to_ptr.vmem [resolvable:$true] %s23
      %29 = dma.hbm_to_vmem [thread:$0]  %s22, 384, %s24, [#allocation4], 128, 128, 8
    $region5: #{tpu_custom_call.1} parent=1 // pred_fallthru
      _
    // Predicated region
    $region6: #{tpu_custom_call.1} parent=1 // pred_check
      _
    $region7: #{tpu_custom_call.1} parent=1 // pred_check_branch
      %31 = sbr.rel (0) target = $region9
    $region8: #{tpu_custom_call.1} parent=1 // pred_region
      %s32 = sadd.s32 0, 0
      %p33 = scmp.lt.s32.totalorder %s32, 0
      %s34 = scalar_select %p33, %s32, 0
      %s35 = smul.u32 3, %s34
      %37 = vsyncadd [#allocation7], 0
      %s38 = smul.addr %s35, 8
      %s39 = scalar_lea.hbm %s1, %s38
      %s40 = sshll.u32 %s39, 4
      %s41 = int_to_ptr.hbm [resolvable:$true] %s40
      %s42 = sshll.u32 [#allocation6], 4
      %s43 = int_to_ptr.vmem [resolvable:$true] %s42
      %48 = dma.hbm_to_vmem [thread:$0]  %s41, 384, %s43, [#allocation7], 128, 128, 8
    $region9: #{tpu_custom_call.1} parent=1 // pred_fallthru
      _
    // Predicated region
    $region10: #{tpu_custom_call.1} parent=1 // pred_check
      _
    $region11: #{tpu_custom_call.1} parent=1 // pred_check_branch
      %50 = sbr.rel (0) target = $region13
    $region12: #{tpu_custom_call.1} parent=1 // pred_region
      %s51 = sadd.s32 0, 0
      %p52 = scmp.lt.s32.totalorder %s51, 0
      %s53 = scalar_select %p52, %s51, 0
      %s54 = smul.u32 3, %s53
      %56 = vsyncadd [#allocation7], 0
      %s57 = smul.addr %s54, 8
      %s58 = scalar_lea.hbm %s2, %s57
      %s59 = sshll.u32 %s58, 4
      %s60 = int_to_ptr.hbm [resolvable:$true] %s59
      %s61 = sshll.u32 [#allocation8], 4
      %s62 = int_to_ptr.vmem [resolvable:$true] %s61
      %67 = dma.hbm_to_vmem [thread:$0]  %s60, 384, %s62, [#allocation7], 128, 128, 8
    $region13: #{tpu_custom_call.1} parent=1 // pred_fallthru
      _
    // Predicated region
    $region14: #{tpu_custom_call.1} parent=1 // pred_check
      _
    $region15: #{tpu_custom_call.1} parent=1 // pred_check_branch
      %69 = sbr.rel (0) target = $region17
    $region16: #{tpu_custom_call.1} parent=1 // pred_region
      %71 = dma.done [#allocation4], 384
    $region17: #{tpu_custom_call.1} parent=1 // pred_fallthru
      _
    // Predicated region
    $region18: #{tpu_custom_call.1} parent=1 // pred_check
      _
    $region19: #{tpu_custom_call.1} parent=1 // pred_check_branch
      %73 = sbr.rel (0) target = $region21
    $region20: #{tpu_custom_call.1} parent=1 // pred_region
      %75 = dma.done [#allocation7], 384
    $region21: #{tpu_custom_call.1} parent=1 // pred_fallthru
      _
    // Predicated region
    $region22: #{tpu_custom_call.1} parent=1 // pred_check
      _
    $region23: #{tpu_custom_call.1} parent=1 // pred_check_branch
      %77 = sbr.rel (0) target = $region25
    $region24: #{tpu_custom_call.1} parent=1 // pred_region
      %79 = dma.done [#allocation7], 384
    $region25: #{tpu_custom_call.1} parent=1 // pred_fallthru
      _
    %s80 = sadd.s32 0, 0
    %p81 = scmp.lt.s32.totalorder %s80, 0
    %s82 = scalar_select %p81, %s80, 0
    %s83 = smul.u32 3, %s82
    %s84 = sadd.s32 0, 0
    %p85 = scmp.lt.s32.totalorder %s84, 0
    %s86 = scalar_select %p85, %s84, 0
    %s87 = smul.u32 3, %s86
    %s88 = sadd.s32 0, 0
    %p89 = scmp.lt.s32.totalorder %s88, 0
    %s90 = scalar_select %p89, %s88, 0
    %s91 = smul.u32 3, %s90
    %p92 = scmp.eq.s32.totalorder 0, 0
    // Predicated region
    $region26: #{tpu_custom_call.1} parent=1 // pred_check
      %p93 = pneg %p92
    $region27: #{tpu_custom_call.1} parent=1 // pred_check_branch
      %95 = sbr.rel (%p93) target = $region29
    $region28: #{tpu_custom_call.1} parent=1 // pred_region
      %vm96 = vcmask 7168
      %97 = vst.msk [vmem:[#allocation2] sm:$0xff] %vm96, 0.0
      %98 = vst.msk [vmem:[#allocation2 + $0x8] sm:$0xff] %vm96, 0.0
      %vm99 = vcmask 3072
      %100 = vst.msk [vmem:[#allocation2 + $0x10] sm:$0xf] %vm99, 0.0
    $region29: #{tpu_custom_call.1} parent=1 // pred_fallthru
      _
    %v101 = vld [vmem:[#allocation3] sm:$0xff]
    %v102 = vld [vmem:[#allocation3 + $0x8] sm:$0xff]
    %v103 = vld [vmem:[#allocation3 + $0x10] sm:$0xf]
    %v104 = vld [vmem:[#allocation6] sm:$0xff]
    %v105 = vld [vmem:[#allocation6 + $0x8] sm:$0xff]
    %v106 = vld [vmem:[#allocation6 + $0x10] sm:$0xf]
    %v107 = vld [vmem:[#allocation8] sm:$0xff]
    %v108 = vld [vmem:[#allocation8 + $0x8] sm:$0xff]
    %v109 = vld [vmem:[#allocation8 + $0x10] sm:$0xf]
    %v110 = vsub.f32 %v101, %v104
    %v111 = vsub.f32 %v102, %v105
    %v112 = vsub.f32 %v103, %v106
    %v113 = vadd.f32 %v110, 1e-06
    %v114 = vadd.f32 %v111, 1e-06
    %v115 = vadd.f32 %v112, 1e-06
    %v116 = vsub.f32 %v101, %v107
    %v117 = vsub.f32 %v102, %v108
    %v118 = vsub.f32 %v103, %v109
    %v119 = vadd.f32 %v116, 1e-06
    %v120 = vadd.f32 %v117, 1e-06
    %v121 = vadd.f32 %v118, 1e-06
    %v122 = vmul.f32 %v113, %v113
    %v123 = vmul.f32 %v114, %v114
    %v124 = vmul.f32 %v115, %v115
    %125 = vadd.xlane.f32.xlu0 %v122
    %v126 = vpop.xlane.xlu0 %125
    %127 = vadd.xlane.f32.xlu0 %v123
    %v128 = vpop.xlane.xlu0 %127
    %vm129 = vcmask 1043456
    %v130 = vsel %vm129, %v124, 0.0
    %131 = vadd.xlane.f32.xlu0 %v130
    %v132 = vpop.xlane.xlu0 %131
    %v133 = vrsqrt.pop %v126
    %v134 = vmul.f32 %v133, %v126
    %v135 = vmul.f32 %v134, %v133
    %v136 = vmul.f32 0.5, %v135
    %v137 = vsub.f32 1.5, %v136
    %v138 = vmul.f32 %v133, %v137
    %v139 = vmul.f32 %v126, %v138
    %vm140 = vcmp.eq.f32.partialorder %v126, inf
    %v141 = vsel %vm140, %v126, %v139
    %vm142 = vcmp.eq.f32.partialorder %v126, 0.0
    %v143 = vand.u32 %v126, 2147483648
    %v144 = vsel %vm142, %v143, %v141
    %v145 = vrsqrt.pop %v128
    %v146 = vmul.f32 %v145, %v128
    %v147 = vmul.f32 %v146, %v145
    %v148 = vmul.f32 0.5, %v147
    %v149 = vsub.f32 1.5, %v148
    %v150 = vmul.f32 %v145, %v149
    %v151 = vmul.f32 %v128, %v150
    %vm152 = vcmp.eq.f32.partialorder %v128, inf
    %v153 = vsel %vm152, %v128, %v151
    %vm154 = vcmp.eq.f32.partialorder %v128, 0.0
    %v155 = vand.u32 %v128, 2147483648
    %v156 = vsel %vm154, %v155, %v153
    %v157 = vrsqrt.pop %v132
    %v158 = vmul.f32 %v157, %v132
    %v159 = vmul.f32 %v158, %v157
    %v160 = vmul.f32 0.5, %v159
    %v161 = vsub.f32 1.5, %v160
    %v162 = vmul.f32 %v157, %v161
    %v163 = vmul.f32 %v132, %v162
    %vm164 = vcmp.eq.f32.partialorder %v132, inf
    %v165 = vsel %vm164, %v132, %v163
    %vm166 = vcmp.eq.f32.partialorder %v132, 0.0
    %v167 = vand.u32 %v132, 2147483648
    %v168 = vsel %vm166, %v167, %v165
    %v169 = vmul.f32 %v119, %v119
    %v170 = vmul.f32 %v120, %v120
    %v171 = vmul.f32 %v121, %v121
    %172 = vadd.xlane.f32.xlu0 %v169
    %v173 = vpop.xlane.xlu0 %172
    %174 = vadd.xlane.f32.xlu0 %v170
    %v175 = vpop.xlane.xlu0 %174
    %v176 = vsel %vm129, %v171, 0.0
    %177 = vadd.xlane.f32.xlu0 %v176
    %v178 = vpop.xlane.xlu0 %177
    %v179 = vrsqrt.pop %v173
    %v180 = vmul.f32 %v179, %v173
    %v181 = vmul.f32 %v180, %v179
    %v182 = vmul.f32 0.5, %v181
    %v183 = vsub.f32 1.5, %v182
    %v184 = vmul.f32 %v179, %v183
    %v185 = vmul.f32 %v173, %v184
    %vm186 = vcmp.eq.f32.partialorder %v173, inf
    %v187 = vsel %vm186, %v173, %v185
    %vm188 = vcmp.eq.f32.partialorder %v173, 0.0
    %v189 = vand.u32 %v173, 2147483648
    %v190 = vsel %vm188, %v189, %v187
    %v191 = vrsqrt.pop %v175
    %v192 = vmul.f32 %v191, %v175
    %v193 = vmul.f32 %v192, %v191
    %v194 = vmul.f32 0.5, %v193
    %v195 = vsub.f32 1.5, %v194
    %v196 = vmul.f32 %v191, %v195
    %v197 = vmul.f32 %v175, %v196
    %vm198 = vcmp.eq.f32.partialorder %v175, inf
    %v199 = vsel %vm198, %v175, %v197
    %vm200 = vcmp.eq.f32.partialorder %v175, 0.0
    %v201 = vand.u32 %v175, 2147483648
    %v202 = vsel %vm200, %v201, %v199
    %v203 = vrsqrt.pop %v178
    %v204 = vmul.f32 %v203, %v178
    %v205 = vmul.f32 %v204, %v203
    %v206 = vmul.f32 0.5, %v205
    %v207 = vsub.f32 1.5, %v206
    %v208 = vmul.f32 %v203, %v207
    %v209 = vmul.f32 %v178, %v208
    %vm210 = vcmp.eq.f32.partialorder %v178, inf
    %v211 = vsel %vm210, %v178, %v209
    %vm212 = vcmp.eq.f32.partialorder %v178, 0.0
    %v213 = vand.u32 %v178, 2147483648
    %v214 = vsel %vm212, %v213, %v211
    %v215 = vsub.f32 %v144, %v190
    %v216 = vsub.f32 %v156, %v202
    %v217 = vsub.f32 %v168, %v214
    %v218 = vadd.f32 %v215, 1.3
    %v219 = vadd.f32 %v216, 1.3
    %v220 = vadd.f32 %v217, 1.3
    %v221 = vmax.f32 %v218, 0.0
    %v222 = vmax.f32 %v219, 0.0
    %v223 = vmax.f32 %v220, 0.0
    %v224 = vld [vmem:[#allocation2] sm:$0xff]
    %v225 = vld [vmem:[#allocation2 + $0x8] sm:$0xff]
    %v226 = vld [vmem:[#allocation2 + $0x10] sm:$0xf]
    %v227 = vadd.f32 %v224, %v221
    %v228 = vadd.f32 %v225, %v222
    %v229 = vadd.f32 %v226, %v223
    %vm230 = vcmask 7168
    %231 = vst.msk [vmem:[#allocation2] sm:$0xff] %vm230, %v227
    %232 = vst.msk [vmem:[#allocation2 + $0x8] sm:$0xff] %vm230, %v228
    %vm233 = vcmask 3072
    %234 = vst.msk [vmem:[#allocation2 + $0x10] sm:$0xf] %vm233, %v229
    // Predicated region
    $region30: #{tpu_custom_call.1} parent=1 // pred_check
      %p235 = pneg %p92
    $region31: #{tpu_custom_call.1} parent=1 // pred_check_branch
      %237 = sbr.rel (%p235) target = $region33
    $region32: #{tpu_custom_call.1} parent=1 // pred_region
      %v238 = vld [vmem:[#allocation2] sm:$0xff]
      %v239 = vld [vmem:[#allocation2 + $0x8] sm:$0xff]
      %v240 = vld [vmem:[#allocation2 + $0x10] sm:$0xf]
      %v241 = vsel %vm230, %v238, 0.0
      %v242 = vsel %vm230, %v239, 0.0
      %v243 = vadd.f32 %v241, %v242
      %v244 = vsel %vm233, %v240, 0.0
      %v245 = vadd.f32 %v243, %v244
      %246 = vadd.xlane.f32.xlu0 %v245
      %v247 = vpop.xlane.xlu0 %246
      %v248 = vrot.slane %v247, 4
      %v249 = vadd.f32 %v247, %v248
      %v250 = vrot.slane %v249, 2
      %v251 = vadd.f32 %v249, %v250
      %v252 = vrot.slane %v251, 1
      %v253 = vadd.f32 %v251, %v252
      %s254 = vtos %v253
      %v255 = vstv %s254
      %256 = vst [vmem:[#allocation9] sm:$0x1] %v255
    $region33: #{tpu_custom_call.1} parent=1 // pred_fallthru
      _
    // Predicated region
    $region34: #{tpu_custom_call.1} parent=1 // pred_check
      _
    $region35: #{tpu_custom_call.1} parent=1 // pred_check_branch
      %258 = sbr.rel (0) target = $region37
    $region36: #{tpu_custom_call.1} parent=1 // pred_region
      %260 = vsyncadd [#allocation5], 0
      %s262 = sshll.u32 [#allocation9], 4
      %s263 = int_to_ptr.vmem [resolvable:$true] %s262
      %s264 = sshll.u32 %s3, 4
      %s265 = int_to_ptr.hbm [resolvable:$true] %s264
      %267 = dma.vmem_to_hbm [thread:$0]  %s263, 16, %s265, [#allocation5]
    $region37: #{tpu_custom_call.1} parent=1 // pred_fallthru
      _
    // Predicated region
    $region38: #{tpu_custom_call.1} parent=1 // pred_check
      _
    $region39: #{tpu_custom_call.1} parent=1 // pred_check_branch
      %269 = sbr.rel (0) target = $region41
    $region40: #{tpu_custom_call.1} parent=1 // pred_region
      %271 = dma.done [#allocation5], 16
    $region41: #{tpu_custom_call.1} parent=1 // pred_fallthru
      _
    %272 = vsyncpa [#allocation4], 1
    %273 = vsyncpa [#allocation7], 1
    %274 = vsyncpa [#allocation5], 1

</llo_original>
